<compile_context>
chip_gen: v5e
topology: v5e:2x2
jax: 0.10.0
libtpu: 0.0.40
codegen_flags: <defaults>
</compile_context>

<pallas_src>
import functools

import jax
import jax.numpy as jnp
from jax.experimental import pallas as pl
from jax.experimental.pallas import tpu as pltpu

KSIZE = 7            # kernel_size=7 branch of the module
PAD = 3              # padding = 3 when kernel_size == 7
TAPS = KSIZE * KSIZE


def _channel_reduce_kernel(x_ref, feat_ref, *, C, c_tile):
    """Running per-pixel channel sum & max; one (batch, spatial, C-tile) step.

    x_ref    : VMEM (1, c_tile, s_tile) block of x viewed as (N, C, H*W)
    feat_ref : VMEM (1, 2, s_tile) resident output block: [sum, max] (f32)
    """
    c = pl.program_id(2)
    x = x_ref[0].astype(jnp.float32)                    # (c_tile, s_tile)

    if C % c_tile != 0:
        # Ragged final C-tile: mask channels >= C (padded block contents are
        # unspecified).  jnp.where keeps NaN/Inf garbage out of the reduction.
        ch = jax.lax.broadcasted_iota(jnp.int32, x.shape, 0) + c * c_tile
        valid = ch < C
        x_sum = jnp.where(valid, x, 0.0)
        x_max = jnp.where(valid, x, -jnp.inf)
    else:
        x_sum = x
        x_max = x

    psum = jnp.sum(x_sum, axis=0)                       # (s_tile,)
    pmax = jnp.max(x_max, axis=0)                       # (s_tile,)

    @pl.when(c == 0)
    def _init():
        feat_ref[0, 0] = psum
        feat_ref[0, 1] = pmax

    @pl.when(c > 0)
    def _accumulate():
        feat_ref[0, 0] = feat_ref[0, 0] + psum
        feat_ref[0, 1] = jnp.maximum(feat_ref[0, 1], pmax)


def _conv7x7_sigmoid_kernel(w_ref, feat_ref, o_ref, pad_ref, *, H, W):
    """7x7 conv (2 -> 1 channels, no bias) over zero-padded [sum, max] planes,
    followed by an exact sigmoid.

    w_ref    : SMEM (98,) f32: [sum-plane taps (1/C folded in), max-plane taps]
    feat_ref : VMEM (B, 2, H, W) unpadded [sum, max] planes (f32)
    o_ref    : VMEM (B, 1, H, W) output block
    pad_ref  : VMEM (B, 2, Hp, Wp) f32 scratch holding the zero-padded planes
    """
    B = feat_ref.shape[0]

    # Zero-pad inside the kernel: no XLA pad op, no extra HBM round trip.
    pad_ref[...] = jnp.zeros_like(pad_ref)
    pad_ref[:, :, PAD:PAD + H, PAD:PAD + W] = feat_ref[...]

    padded = pad_ref[...]                               # (B, 2, Hp, Wp)
    sum_pad = padded[:, 0]                              # (B, Hp, Wp)
    max_pad = padded[:, 1]

    # 7 lane-shifted views per plane (14 lane shifts total); the 49 per-tap
    # slices in the loop below are then sublane-only shifts.
    sum_sh = [sum_pad[:, :, dx:dx + W] for dx in range(KSIZE)]   # (B, Hp, W)
    max_sh = [max_pad[:, :, dx:dx + W] for dx in range(KSIZE)]

    # Four independent accumulators break the serial VALU add chain.
    n_acc = 4
    accs = [jnp.zeros((B, H, W), jnp.float32) for _ in range(n_acc)]
    t = 0
    for dy in range(KSIZE):
        for dx in range(KSIZE):
            w_s = w_ref[dy * KSIZE + dx]           # sum-plane tap (1/C folded)
            w_m = w_ref[TAPS + dy * KSIZE + dx]    # max-plane tap
            accs[t % n_acc] = accs[t % n_acc] + (
                w_s * sum_sh[dx][:, dy:dy + H, :]
                + w_m * max_sh[dx][:, dy:dy + H, :])
            t += 1
    acc = (accs[0] + accs[1]) + (accs[2] + accs[3])

    # Exact sigmoid; exp + divide land on the otherwise-idle EUP slot and
    # saturate to exactly 0 / 1 for large |acc|.
    out = 1.0 / (1.0 + jnp.exp(-acc))
    o_ref[...] = out[:, None, :, :].astype(o_ref.dtype)


def _pick_spatial_split(S, N):
    """Second 'parallel' grid axis for pass 1: split space 2-way (lane-dense
    128-multiples only) when the batch alone cannot keep both v7x TCs busy."""
    if N < 2 and S % 256 == 0:
        return 2
    return 1


def _pick_c_tile(C, s_tile, itemsize, budget_bytes=12 << 20):
    """Largest C-tile whose REAL (lane-padded) VMEM block stays under budget.
    Tiles smaller than C stay at sublane granularity; ragged C is handled by
    masking in the kernel (no silent fallback to c_tile=1)."""
    sublane = max(8, 32 // itemsize)              # 8 (f32) / 16 (bf16) / 32 (i8)
    lanes = ((s_tile + 127) // 128) * 128         # lane-padded row width
    row_bytes = lanes * itemsize
    cap = max(1, budget_bytes // row_bytes)
    if C <= cap:
        return C
    c_tile = max(sublane, (cap // sublane) * sublane)
    return C if c_tile >= C else c_tile


def _pick_batch_tile(N, max_tile=8):
    best = 1
    for d in range(1, min(N, max_tile) + 1):
        if N % d == 0:
            best = d
    return best


def spatial_attention(x, weight):
    """x: (N, C, H, W); weight: (1, 2, 7, 7) conv1 weight (no bias).
    Returns sigmoid(conv2d(concat([mean_c(x), max_c(x)], 1))), shape (N,1,H,W)."""
    N, C, H, W = x.shape
    S = H * W
    Hp, Wp = H + 2 * PAD, W + 2 * PAD

    # Fold 1/C of the channel mean into the avg-channel taps so the kernels
    # only ever need the channel SUM (no full-plane divide).
    w = weight.astype(jnp.float32)
    w_flat = jnp.concatenate(
        [(w[0, 0] / float(C)).reshape(-1), w[0, 1].reshape(-1)])       # (98,)

    # ---- Pass 1: channel sum / max over lane-dense (N, C, H*W) view. ----
    x_flat = x.reshape(N, C, S)                  # free, contiguous view
    n_s = _pick_spatial_split(S, N)
    s_tile = S // n_s
    c_tile = _pick_c_tile(C, s_tile, x.dtype.itemsize)
    n_c = pl.cdiv(C, c_tile)

    feat = pl.pallas_call(
        functools.partial(_channel_reduce_kernel, C=C, c_tile=c_tile),
        out_shape=jax.ShapeDtypeStruct((N, 2, S), jnp.float32),
        grid=(N, n_s, n_c),
        in_specs=[pl.BlockSpec((1, c_tile, s_tile), lambda n, s, c: (n, c, s))],
        out_specs=pl.BlockSpec((1, 2, s_tile), lambda n, s, c: (n, 0, s)),
        compiler_params=pltpu.CompilerParams(
            dimension_semantics=("parallel", "parallel", "arbitrary"),
            vmem_limit_bytes=40 * 1024 * 1024),
    )(x_flat)

    # ---- Pass 2: 7x7 conv + sigmoid, batch-tiled; padding done in-kernel. ----
    b_tile = _pick_batch_tile(N)
    return pl.pallas_call(
        functools.partial(_conv7x7_sigmoid_kernel, H=H, W=W),
        out_shape=jax.ShapeDtypeStruct((N, 1, H, W), x.dtype),
        grid=(N // b_tile,),
        in_specs=[
            pl.BlockSpec(memory_space=pltpu.MemorySpace.SMEM),   # 98 conv taps
            pl.BlockSpec((b_tile, 2, H, W), lambda b: (b, 0, 0, 0)),
        ],
        out_specs=pl.BlockSpec((b_tile, 1, H, W), lambda b: (b, 0, 0, 0)),
        scratch_shapes=[pltpu.VMEM((b_tile, 2, Hp, Wp), jnp.float32)],
        compiler_params=pltpu.CompilerParams(
            dimension_semantics=("parallel",)),
    )(w_flat, feat.reshape(N, 2, H, W))


def spatial_attention_reference(x, weight):
    """Pure-JAX reference mirroring the PyTorch forward."""
    avg_out = jnp.mean(x, axis=1, keepdims=True)
    max_out = jnp.max(x, axis=1, keepdims=True)
    feat = jnp.concatenate([avg_out, max_out], axis=1)
    y = jax.lax.conv_general_dilated(
        feat, weight, window_strides=(1, 1),
        padding=((PAD, PAD), (PAD, PAD)),
        dimension_numbers=("NCHW", "OIHW", "NCHW"))
    return jax.nn.sigmoid(y)


if __name__ == "__main__":
    key = jax.random.PRNGKey(0)
    kx, kw = jax.random.split(key)

    N, C, H, W = 2, 4, 16, 16
    x = jax.random.normal(kx, (N, C, H, W), dtype=jnp.float32)
    # Deterministic init of conv1 weight: (out=1, in=2, 7, 7), no bias.
    weight = 0.1 * jax.random.normal(kw, (1, 2, KSIZE, KSIZE), dtype=jnp.float32)

    out = jax.block_until_ready(spatial_attention(x, weight))

    ref = spatial_attention_reference(x, weight)
    assert out.shape == (N, 1, H, W)
    assert jnp.allclose(out, ref, atol=1e-4, rtol=1e-4), "mismatch vs reference"

    print("KERNEL_OK")
</pallas_src>

<mosaic_0001>
module attributes {stable_mosaic.version = 11 : i64} {
  func.func @_channel_reduce_kernel(%arg0: i32, %arg1: i32, %arg2: i32, %arg3: memref<1x4x256xf32, #tpu.memory_space<vmem>>, %arg4: memref<1x2x256xf32, #tpu.memory_space<vmem>>) attributes {dimension_semantics = [#tpu.dimension_semantics<parallel>, #tpu.dimension_semantics<parallel>, #tpu.dimension_semantics<arbitrary>], iteration_bounds = array<i64: 2, 1, 1>, scalar_prefetch = 0 : i64, scratch_operands = 0 : i64, tpu.core_type = #tpu.core_type<tc>, window_params = [{transform_indices = @transform_0, window_bounds = array<i64: 1, 4, 256>}, {transform_indices = @transform_1, window_bounds = array<i64: 1, 2, 256>}]} {
    %c0 = arith.constant 0 : index
    %c0_0 = arith.constant 0 : index
    %c0_1 = arith.constant 0 : index
    %0 = vector.load %arg3[%c0, %c0_0, %c0_1] : memref<1x4x256xf32, #tpu.memory_space<vmem>>, vector<1x4x256xf32>
    %1 = vector.shape_cast %0 : vector<1x4x256xf32> to vector<4x256xf32>
    %cst = arith.constant dense<0.000000e+00> : vector<256xf32>
    %2 = vector.multi_reduction <add>, %1, %cst [0] : vector<4x256xf32> to vector<256xf32>
    %cst_2 = arith.constant dense<0xFF800000> : vector<256xf32>
    %3 = vector.multi_reduction <maximumf>, %1, %cst_2 [0] : vector<4x256xf32> to vector<256xf32>
    %c0_i32 = arith.constant 0 : i32
    %4 = arith.cmpi eq, %arg2, %c0_i32 : i32
    %5 = arith.extui %4 : i1 to i32
    %c0_i32_3 = arith.constant 0 : i32
    %6 = arith.cmpi ne, %5, %c0_i32_3 : i32
    scf.if %6 {
      %c0_6 = arith.constant 0 : index
      %c0_7 = arith.constant 0 : index
      %c0_8 = arith.constant 0 : index
      %10 = vector.load %arg4[%c0_6, %c0_7, %c0_8] : memref<1x2x256xf32, #tpu.memory_space<vmem>>, vector<1x1x256xf32>
      %11 = vector.shape_cast %10 : vector<1x1x256xf32> to vector<256xf32>
      %12 = vector.shape_cast %2 : vector<256xf32> to vector<1x1x256xf32>
      tpu.vector_store %arg4[%c0_6, %c0_7, %c0_8], %12 {strides = array<i32>} : memref<1x2x256xf32, #tpu.memory_space<vmem>>, vector<1x1x256xf32>,
      %c0_9 = arith.constant 0 : index
      %c1 = arith.constant 1 : index
      %c0_10 = arith.constant 0 : index
      %13 = vector.load %arg4[%c0_9, %c1, %c0_10] : memref<1x2x256xf32, #tpu.memory_space<vmem>>, vector<1x1x256xf32>
      %14 = vector.shape_cast %13 : vector<1x1x256xf32> to vector<256xf32>
      %15 = vector.shape_cast %3 : vector<256xf32> to vector<1x1x256xf32>
      tpu.vector_store %arg4[%c0_9, %c1, %c0_10], %15 {strides = array<i32>} : memref<1x2x256xf32, #tpu.memory_space<vmem>>, vector<1x1x256xf32>,
    } else {
    }
    %c0_i32_4 = arith.constant 0 : i32
    %7 = arith.cmpi sgt, %arg2, %c0_i32_4 : i32
    %8 = arith.extui %7 : i1 to i32
    %c0_i32_5 = arith.constant 0 : i32
    %9 = arith.cmpi ne, %8, %c0_i32_5 : i32
    scf.if %9 {
      %c0_6 = arith.constant 0 : index
      %c0_7 = arith.constant 0 : index
      %c0_8 = arith.constant 0 : index
      %10 = vector.load %arg4[%c0_6, %c0_7, %c0_8] : memref<1x2x256xf32, #tpu.memory_space<vmem>>, vector<1x1x256xf32>
      %11 = vector.shape_cast %10 : vector<1x1x256xf32> to vector<256xf32>
      %12 = arith.addf %11, %2 : vector<256xf32>
      %c0_9 = arith.constant 0 : index
      %c0_10 = arith.constant 0 : index
      %c0_11 = arith.constant 0 : index
      %13 = vector.load %arg4[%c0_9, %c0_10, %c0_11] : memref<1x2x256xf32, #tpu.memory_space<vmem>>, vector<1x1x256xf32>
      %14 = vector.shape_cast %13 : vector<1x1x256xf32> to vector<256xf32>
      %15 = vector.shape_cast %12 : vector<256xf32> to vector<1x1x256xf32>
      tpu.vector_store %arg4[%c0_9, %c0_10, %c0_11], %15 {strides = array<i32>} : memref<1x2x256xf32, #tpu.memory_space<vmem>>, vector<1x1x256xf32>,
      %c0_12 = arith.constant 0 : index
      %c1 = arith.constant 1 : index
      %c0_13 = arith.constant 0 : index
      %16 = vector.load %arg4[%c0_12, %c1, %c0_13] : memref<1x2x256xf32, #tpu.memory_space<vmem>>, vector<1x1x256xf32>
      %17 = vector.shape_cast %16 : vector<1x1x256xf32> to vector<256xf32>
      %18 = arith.maximumf %17, %3 : vector<256xf32>
      %c0_14 = arith.constant 0 : index
      %c1_15 = arith.constant 1 : index
      %c0_16 = arith.constant 0 : index
      %19 = vector.load %arg4[%c0_14, %c1_15, %c0_16] : memref<1x2x256xf32, #tpu.memory_space<vmem>>, vector<1x1x256xf32>
      %20 = vector.shape_cast %19 : vector<1x1x256xf32> to vector<256xf32>
      %21 = vector.shape_cast %18 : vector<256xf32> to vector<1x1x256xf32>
      tpu.vector_store %arg4[%c0_14, %c1_15, %c0_16], %21 {strides = array<i32>} : memref<1x2x256xf32, #tpu.memory_space<vmem>>, vector<1x1x256xf32>,
    } else {
    }
    return
  }
  func.func @transform_0(%arg0: i32, %arg1: i32, %arg2: i32) -> (i32, i32, i32) {
    %c0_i32 = arith.constant 0 : i32
    return %arg0, %arg2, %arg1 : i32, i32, i32
  }
  func.func @transform_1(%arg0: i32, %arg1: i32, %arg2: i32) -> (i32, i32, i32) {
    %c0_i32 = arith.constant 0 : i32
    %c0_i32_0 = arith.constant 0 : i32
    return %arg0, %c0_i32, %arg1 : i32, i32, i32
  }
}

</mosaic_0001>

<llo_original>
// kernel: tpu_custom_call.1
$region0: #{tpu_custom_call.1}
  #allocation0 [shape = 'u32[]', space=smem, size = 0x4, offset = 0x4, fixed_abs, tag = 'smem constant byte address 0x4 - core index']
  #allocation1 [shape = 'u32[72,128]{1,0:T(1,128)}', space=vmem, size = 0x9000, scoped, tag = 'internal scratch']
  %s0 = inlined_call_operand.hbm [shape: f32[2,4,256], index: 0, kind: input, shape index: {}]
  %s1 = inlined_call_operand.hbm [shape: f32[2,2,256], index: 1, kind: output, shape index: {}]
  %s2 = sld [smem:[#allocation0]]
  $region49: #{tpu_custom_call.1} parent=0
    _
  %s4 = ssub.s32 1, %s2
  %s5 = scalar_select 0, %s4, %s2
  $region1: #{tpu_custom_call.1} parent=0
    #allocation2 [shape = 'u8[8192]{0}', space=vmem, size = 0x2000, scoped, tag = 'input window, operand 0']
    #allocation3 [shape = 's32[2]{0}', space=sflag, size = 0x8, scoped, tag = 'scoped memory for tpu_custom_call.1']
    #allocation4 [shape = 's32[2]{0}', space=sflag, size = 0x8, scoped, tag = 'scoped memory for tpu_custom_call.1']
    #allocation5 [shape = 'u8[4096]{0}', space=vmem, size = 0x1000, scoped, tag = 'output window, operand 0']
    %6 = vsyncpa [#allocation3], 0
    %s7 = scalar_lea.sflag [#allocation3], 1
    %8 = vsyncpa %s7, 0
    %9 = vsyncpa [#allocation4], 0
    %s10 = scalar_lea.sflag [#allocation4], 1
    %11 = vsyncpa %s10, 0
    loop: start=0, step=1, limit=4
    $region2: #{tpu_custom_call.1} parent=1 // loop_pre_header
      _
    $region3: #{tpu_custom_call.1} parent=1 // loop_header
      %s13 = sphi 0, %s17
      %p14 = scmp.ge.s32.totalorder %s13, 4
      %s20 = sphi 0, %s39
      %s21 = sphi 0, %s35
      %s22 = sphi 0, %s31
      %s23 = sphi 0, %s20
      %s24 = sphi 0, %s21
      %s25 = sphi 0, %s22
      %s26 = sphi 0, %s23
      %s27 = sphi 0, %s24
      %s28 = sphi 0, %s25
      %s46 = sphi 0, %s48
      %s49 = sphi 0, %s46
      %s50 = sphi 0, %s49
      %s66 = sphi 0, %s50
      %s74 = sphi 0, %s76
      %s77 = sphi 0, %s74
      %s78 = sphi 0, %s77
      %s94 = sphi 0, %s78
    $region4: #{tpu_custom_call.1} parent=1 // loop_header_branch
      %16 = sbr.rel (%p14) target = $region8
    $region5: #{tpu_custom_call.1} parent=1 // loop_body
      %s18 = ssub.s32 %s13, 1
      %s19 = ssub.s32 %s13, 2
      %s29 = sadd.s32 1, %s22
      %p30 = scmp.ge.s32.totalorder %s29, 1
      %s31 = scalar_select %p30, 0, %s29
      %s32 = sadd.s32 1, %s21
      %s33 = scalar_select %p30, %s32, %s21
      %p34 = scmp.ge.s32.totalorder %s33, 1
      %s35 = scalar_select %p34, 0, %s33
      %s36 = sadd.s32 1, %s20
      %s37 = scalar_select %p34, %s36, %s20
      %p38 = scmp.ge.s32.totalorder %s37, 2
      %s39 = scalar_select %p38, 0, %s37
      %s40 = ssub.s32 %s20, %s39
      %s41 = ssub.s32 %s22, %s31
      %s42 = sor.u32 %s40, %s41
      %s43 = ssub.s32 %s21, %s35
      %s44 = sor.u32 %s42, %s43
      %p45 = scmp.eq.s32.totalorder %s44, 0
      %s47 = sadd.s32 %s46, 1
      %s48 = scalar_select %p45, %s46, %s47
      %p51 = pneg %p45
      %p52 = scmp.eq.s32.totalorder %s13, 1
      %p53 = por %p51, %p52
      %p54 = scmp.ne.s32.totalorder %s46, %s49
      %p55 = scmp.eq.s32.totalorder %s13, 0
      %p56 = por %p54, %p55
      %p57 = scmp.ne.s32.totalorder %s46, %s49
      %p58 = scmp.eq.s32.totalorder %s18, 1
      %p59 = por %p57, %p58
      %p60 = scmp.ne.s32.totalorder %s49, %s50
      %p61 = scmp.eq.s32.totalorder %s18, 0
      %p62 = por %p60, %p61
      %p63 = scmp.ne.s32.totalorder %s49, %s50
      %p64 = scmp.eq.s32.totalorder %s19, 1
      %p65 = por %p63, %p64
      %p67 = scmp.ne.s32.totalorder %s50, %s66
      %p68 = scmp.eq.s32.totalorder %s19, 0
      %p69 = por %p67, %p68
      %s70 = ssub.s32 %s20, %s39
      %s71 = ssub.s32 %s21, %s35
      %s72 = sor.u32 %s70, %s71
      %p73 = scmp.eq.s32.totalorder %s72, 0
      %s75 = sadd.s32 %s74, 1
      %s76 = scalar_select %p73, %s74, %s75
      %p79 = pneg %p73
      %p80 = scmp.eq.s32.totalorder %s13, 1
      %p81 = por %p79, %p80
      %p82 = scmp.ne.s32.totalorder %s74, %s77
      %p83 = scmp.eq.s32.totalorder %s13, 0
      %p84 = por %p82, %p83
      %p85 = scmp.ne.s32.totalorder %s74, %s77
      %p86 = scmp.eq.s32.totalorder %s18, 1
      %p87 = por %p85, %p86
      %p88 = scmp.ne.s32.totalorder %s77, %s78
      %p89 = scmp.eq.s32.totalorder %s18, 0
      %p90 = por %p88, %p89
      %p91 = scmp.ne.s32.totalorder %s77, %s78
      %p92 = scmp.eq.s32.totalorder %s19, 1
      %p93 = por %p91, %p92
      %p95 = scmp.ne.s32.totalorder %s78, %s94
      %p96 = scmp.eq.s32.totalorder %s19, 0
      %p97 = por %p95, %p96
      %p98 = scmp.le.s32.totalorder 1, %s13
      %p99 = scmp.lt.s32.totalorder %s13, 3
      %p100 = pnand %p98, %p99
      %p101 = pneg %p100
      // Predicated region
      $region9: #{tpu_custom_call.1} parent=5 // pred_check
        _
      $region10: #{tpu_custom_call.1} parent=5 // pred_check_branch
        %103 = sbr.rel (%p100) target = $region12
      $region11: #{tpu_custom_call.1} parent=5 // pred_region
        %s104 = ssub.s32 %s13, 1
      $region12: #{tpu_custom_call.1} parent=5 // pred_fallthru
        _
      %p105 = scmp.lt.s32.totalorder %s13, 2
      // Predicated region
      $region13: #{tpu_custom_call.1} parent=5 // pred_check
        %p106 = pneg %p105
      $region14: #{tpu_custom_call.1} parent=5 // pred_check_branch
        %108 = sbr.rel (%p106) target = $region16
      $region15: #{tpu_custom_call.1} parent=5 // pred_region
        // Predicated region
        $region17: #{tpu_custom_call.1} parent=15 // pred_check
          %p109 = pneg %p56
        $region18: #{tpu_custom_call.1} parent=15 // pred_check_branch
          %111 = sbr.rel (%p109) target = $region20
        $region19: #{tpu_custom_call.1} parent=15 // pred_region
          %s112 = sand.u32 %s46, 1
          %s113 = scalar_lea.sflag [#allocation3], %s112
          %s114 = sand.u32 %s46, 1
          %s115 = smul.addr %s114, 8
          %s116 = scalar_lea.vmem [#allocation2], %s115
          %s117 = smul.u32 2, %s21
          %119 = vsyncadd %s113, 0
          %s120 = smul.addr %s22, 2
          %s121 = sadd.s32 %s117, %s120
          %s122 = smul.addr %s20, 2
          %s123 = sadd.s32 %s121, %s122
          %s124 = smul.addr %s123, 4
          %s125 = scalar_lea.hbm %s0, %s124
          %s127 = sshll.u32 %s125, 4
          %s128 = int_to_ptr.hbm [resolvable:$true] %s127
          %s129 = sshll.u32 %s116, 4
          %s130 = int_to_ptr.vmem [resolvable:$true] %s129
          %132 = dma.hbm_to_vmem [thread:$0]  %s128, 128, %s130, %s113
        $region20: #{tpu_custom_call.1} parent=15 // pred_fallthru
          _
      $region16: #{tpu_custom_call.1} parent=5 // pred_fallthru
        _
      %p133 = scmp.le.s32.totalorder 1, %s13
      %p134 = scmp.lt.s32.totalorder %s13, 3
      %p135 = pnand %p133, %p134
      %p136 = pneg %p135
      // Predicated region
      $region21: #{tpu_custom_call.1} parent=5 // pred_check
        _
      $region22: #{tpu_custom_call.1} parent=5 // pred_check_branch
        %138 = sbr.rel (%p135) target = $region24
      $region23: #{tpu_custom_call.1} parent=5 // pred_region
        %s139 = ssub.s32 %s13, 1
        %s140 = sand.u32 %s49, 1
        %s141 = scalar_lea.sflag [#allocation3], %s140
        %s142 = sand.u32 %s49, 1
        %s143 = smul.addr %s142, 8
        %s144 = scalar_lea.vmem [#allocation2], %s143
        // Predicated region
        $region25: #{tpu_custom_call.1} parent=23 // pred_check
          %p145 = pneg %p62
        $region26: #{tpu_custom_call.1} parent=23 // pred_check_branch
          %147 = sbr.rel (%p145) target = $region28
        $region27: #{tpu_custom_call.1} parent=23 // pred_region
          %149 = dma.done %s141, 128
        $region28: #{tpu_custom_call.1} parent=23 // pred_fallthru
          _
        %s150 = sand.u32 %s49, 1
        %s151 = scalar_lea.sflag [#allocation3], %s150
        %s152 = sand.u32 %s49, 1
        %s153 = smul.addr %s152, 8
        %s154 = scalar_lea.vmem [#allocation2], %s153
        %p155 = pneg %p62
        %p156 = pneg %p59
        %p157 = pneg %p90
        %p158 = pneg %p87
        %s159 = sand.u32 %s77, 1
        %s160 = scalar_lea.sflag [#allocation4], %s159
        %s161 = sand.u32 %s77, 1
        %s162 = smul.addr %s161, 4
        %s163 = scalar_lea.vmem [#allocation5], %s162
        %s164 = smul.u32 2, %s24
        %s165 = smul.u32 2, %s24
        %v166 = vld [vmem:[%s144] sm:$0xff]
        %168 = vst [vmem:[#allocation1] ss:$2 sm:$0xff] %v166
        %v169 = vld.sshfl [vmem:[#allocation1] sm:$0xff pattern:$0x75316420]
        %v170 = vld.sshfl [vmem:[#allocation1 + $0x8] sm:$0xff pattern:$0x75316420]
        %vm173 = vcmask 1043456
        %v174 = vsel %vm173, %v169, 0.0
        %v175 = vrot.slane %v174, 4
        %v176 = vadd.f32 %v174, %v175
        %v177 = vrot.slane %v176, 2
        %v178 = vadd.f32 %v176, %v177
        %v179 = vrot.slane %v178, 1
        %v180 = vadd.f32 %v178, %v179
        %v181 = vsel %vm173, %v170, 0.0
        %v182 = vrot.slane %v181, 4
        %v183 = vadd.f32 %v181, %v182
        %v184 = vrot.slane %v183, 2
        %v185 = vadd.f32 %v183, %v184
        %v186 = vrot.slane %v185, 1
        %v187 = vadd.f32 %v185, %v186
        %188 = vst [vmem:[#allocation1] ss:$2 sm:$0xff] %v166
        %v189 = vld.sshfl [vmem:[#allocation1] sm:$0xff pattern:$0x75316420]
        %v190 = vld.sshfl [vmem:[#allocation1 + $0x8] sm:$0xff pattern:$0x75316420]
        %v193 = vsel %vm173, %v189, -inf
        %v194 = vrot.slane %v193, 4
        %v195 = vmax.f32 %v193, %v194
        %v196 = vrot.slane %v195, 2
        %v197 = vmax.f32 %v195, %v196
        %v198 = vrot.slane %v197, 1
        %v199 = vmax.f32 %v197, %v198
        %v200 = vsel %vm173, %v190, -inf
        %v201 = vrot.slane %v200, 4
        %v202 = vmax.f32 %v200, %v201
        %v203 = vrot.slane %v202, 2
        %v204 = vmax.f32 %v202, %v203
        %v205 = vrot.slane %v204, 1
        %v206 = vmax.f32 %v204, %v205
        %p207 = scmp.eq.s32.totalorder %s25, 0
        // Predicated region
        $region29: #{tpu_custom_call.1} parent=23 // pred_check
          %p208 = pneg %p207
        $region30: #{tpu_custom_call.1} parent=23 // pred_check_branch
          %210 = sbr.rel (%p208) target = $region32
        $region31: #{tpu_custom_call.1} parent=23 // pred_region
          %v213 = vrot.slane %v187, 7
          %vm214 = vcmask 1040384
          %v215 = vsel %vm214, %v180, %v213
          %v217 = vlaneseq
          %vm218 = vcmp.ge.s32.totalorder %v217, 0
          %vm219 = vcmp.lt.s32.totalorder %v217, 256
          %vm220 = vmand %vm218, %vm219
          %221 = vst.msk [vmem:[%s163] ss:$2 sm:$0x3] %vm220, %v215
          %v224 = vrot.slane %v206, 7
          %v225 = vsel %vm214, %v199, %v224
          %s227 = scalar_lea.vmem %s163, 1 [#allocation5]
          %228 = vst.msk [vmem:[%s227] ss:$2 sm:$0x3] %vm220, %v225
        $region32: #{tpu_custom_call.1} parent=23 // pred_fallthru
          _
        %p229 = scmp.gt.s32.totalorder %s25, 0
        // Predicated region
        $region33: #{tpu_custom_call.1} parent=23 // pred_check
          %p230 = pneg %p229
        $region34: #{tpu_custom_call.1} parent=23 // pred_check_branch
          %232 = sbr.rel (%p230) target = $region36
        $region35: #{tpu_custom_call.1} parent=23 // pred_region
          %v233 = vld [vmem:[%s163] ss:$2 sm:$0x3]
          %v236 = vrot.slane %v187, 7
          %vm237 = vcmask 1040384
          %v238 = vsel %vm237, %v180, %v236
          %v240 = vadd.f32 %v233, %v238
          %v241 = vlaneseq
          %vm242 = vcmp.ge.s32.totalorder %v241, 0
          %vm243 = vcmp.lt.s32.totalorder %v241, 256
          %vm244 = vmand %vm242, %vm243
          %245 = vst.msk [vmem:[%s163] ss:$2 sm:$0x3] %vm244, %v240
          %s246 = scalar_lea.vmem %s163, 1 [#allocation5]
          %v247 = vld [vmem:[%s246] ss:$2 sm:$0x3]
          %v250 = vrot.slane %v206, 7
          %v251 = vsel %vm237, %v199, %v250
          %v253 = vmax.f32 %v247, %v251
          %254 = vst.msk [vmem:[%s246] ss:$2 sm:$0x3] %vm244, %v253
        $region36: #{tpu_custom_call.1} parent=23 // pred_fallthru
          _
        %s255 = sand.u32 %s77, 1
        %s256 = scalar_lea.sflag [#allocation4], %s255
        %s257 = sand.u32 %s77, 1
        %s258 = smul.addr %s257, 4
        %s259 = scalar_lea.vmem [#allocation5], %s258
        // Predicated region
        $region37: #{tpu_custom_call.1} parent=23 // pred_check
          %p260 = pneg %p87
        $region38: #{tpu_custom_call.1} parent=23 // pred_check_branch
          %262 = sbr.rel (%p260) target = $region40
        $region39: #{tpu_custom_call.1} parent=23 // pred_region
          %s263 = smul.u32 2, %s24
          %265 = vsyncadd %s256, 0
          %s266 = smul.addr %s23, 2
          %s267 = sadd.s32 %s263, %s266
          %s268 = smul.addr %s267, 2
          %s269 = scalar_lea.hbm %s1, %s268
          %s271 = sshll.u32 %s259, 4
          %s272 = int_to_ptr.vmem [resolvable:$true] %s271
          %s273 = sshll.u32 %s269, 4
          %s274 = int_to_ptr.hbm [resolvable:$true] %s273
          %276 = dma.vmem_to_hbm [thread:$0]  %s272, 64, %s274, %s256
        $region40: #{tpu_custom_call.1} parent=23 // pred_fallthru
          _
      $region24: #{tpu_custom_call.1} parent=5 // pred_fallthru
        _
      %p277 = scmp.le.s32.totalorder 2, %s13
      // Predicated region
      $region41: #{tpu_custom_call.1} parent=5 // pred_check
        %p278 = pneg %p277
      $region42: #{tpu_custom_call.1} parent=5 // pred_check_branch
        %280 = sbr.rel (%p278) target = $region44
      $region43: #{tpu_custom_call.1} parent=5 // pred_region
        %s281 = ssub.s32 %s13, 2
        // Predicated region
        $region45: #{tpu_custom_call.1} parent=43 // pred_check
          %p282 = pneg %p93
        $region46: #{tpu_custom_call.1} parent=43 // pred_check_branch
          %284 = sbr.rel (%p282) target = $region48
        $region47: #{tpu_custom_call.1} parent=43 // pred_region
          %s285 = sand.u32 %s78, 1
          %s286 = scalar_lea.sflag [#allocation4], %s285
          %s287 = sand.u32 %s78, 1
          %s288 = smul.addr %s287, 4
          %s289 = scalar_lea.vmem [#allocation5], %s288
          %291 = dma.done %s286, 64
        $region48: #{tpu_custom_call.1} parent=43 // pred_fallthru
          _
      $region44: #{tpu_custom_call.1} parent=5 // pred_fallthru
        _
    $region6: #{tpu_custom_call.1} parent=1 // loop_footer
      %s17 = sadd.s32 1, %s13
    $region7: #{tpu_custom_call.1} parent=1 // loop_footer_branch
      %12 = sbr.rel target = $region3
    $region8: #{tpu_custom_call.1} parent=1 // loop_exit
      _
    %292 = vsyncpa [#allocation3], 1
    %s293 = scalar_lea.sflag [#allocation3], 1
    %294 = vsyncpa %s293, 1
    %295 = vsyncpa [#allocation4], 1
    %s296 = scalar_lea.sflag [#allocation4], 1
    %297 = vsyncpa %s296, 1

</llo_original>
